<compile_context>
chip_gen: v7x
topology: tpu7x:2x2x1
jax: 0.10.0
libtpu: 0.0.40
codegen_flags: <defaults>
</compile_context>

<pallas_src>
import functools

import jax
import jax.numpy as jnp
from jax.experimental import pallas as pl
from jax.experimental.pallas import tpu as pltpu


def _swiglu_kernel(x_ref, w12_ref, b12_ref, w3_ref, b3_ref, o_ref, acc_ref,
                   *, th, nh, resident, approx_sigmoid):
    """One (row-tile, hidden-tile) step.

    w12 packs [W1_tile | W2_tile] along its columns for every hidden tile, so
    a single dot produces both the gate and value activations of this slice:

      x12  = x @ W12_h + b12_h                    (tm, 2*th)  f32
      hid  = SiLU(x12[:, :th]) * x12[:, th:]      (tm, th)    f32
      acc += hid @ W3_h                           (tm, Cout)  f32 (init = b3)
    """
    h = pl.program_id(1)

    @pl.when(h == 0)
    def _():
        # Fold the output bias into the accumulator init (saves an epilogue add).
        acc_ref[...] = jnp.broadcast_to(b3_ref[...].astype(jnp.float32),
                                        acc_ref.shape)

    if resident and nh > 1:
        # Whole weight matrices live in VMEM (DMA'd once); slice this tile.
        # th is always a multiple of 128 on this path.
        c0 = pl.multiple_of(h * (2 * th), 128)
        r0 = pl.multiple_of(h * th, 128)
        w12 = w12_ref[:, pl.ds(c0, 2 * th)]
        b12 = b12_ref[:, pl.ds(c0, 2 * th)]
        w3 = w3_ref[pl.ds(r0, th), :]
    else:
        # Non-resident (streamed per hidden tile) or a single hidden tile.
        w12 = w12_ref[...]
        b12 = b12_ref[...]
        w3 = w3_ref[...]

    # Explicit cast keeps the MXU on the bf16 path when weights are bf16
    # (no silent f32 promotion); f32 accumulation via preferred_element_type.
    x = x_ref[...].astype(w12.dtype)
    x12 = jnp.dot(x, w12, preferred_element_type=jnp.float32)
    x12 = x12 + b12.astype(jnp.float32)

    x1 = x12[:, :th]
    x2 = x12[:, th:]

    if approx_sigmoid:
        # exp -> EUP, reciprocal -> EUP (approx): keeps the VPU slots free.
        sig = pl.reciprocal(1.0 + jnp.exp(-x1), approx=True)
    else:
        sig = 1.0 / (1.0 + jnp.exp(-x1))
    hidden = x1 * sig * x2

    acc_ref[...] += jnp.dot(hidden.astype(w3.dtype), w3,
                            preferred_element_type=jnp.float32)

    @pl.when(h == pl.num_programs(1) - 1)
    def _():
        o_ref[...] = acc_ref[...].astype(o_ref.dtype)


def _round_up(v, m):
    return (v + m - 1) // m * m


def _device_plan():
    """Per-generation (row_tile, VMEM budget bytes, min row tiles)."""
    try:
        kind = jax.devices()[0].device_kind.lower()
    except Exception:
        kind = ""
    if "v5" in kind or "v6" in kind or "trillium" in kind:
        # 128 MiB physical VMEM, single TensorCore per chip.
        return 1024, 96 * 1024 * 1024, 1
    # v7x: 64 MiB VMEM per core, 2 TensorCores; also the conservative default.
    return 512, 48 * 1024 * 1024, 2


def _pick_hidden_tile(H, resident):
    # Prefer 256-lane multiples so the w3 contraction keeps the 256-wide MXU
    # fed on v6e/v7x; th=1024 allowed only when the weights are VMEM-resident.
    cands = (512, 384, 256, 1024, 128) if resident else (512, 384, 256, 128)
    for th in cands:
        if H % th == 0:
            return th
    return H            # small / odd hidden dims: block == full array dim


def swiglu_forward(x, w1, b1, w2, b2, w3, b3, *, row_tile=None,
                   vmem_budget=None, approx_sigmoid=True):
    """x: (..., C).  Torch Linear layouts: w1, w2: (H, C); w3: (Cout, H)."""
    orig_shape = x.shape
    C = orig_shape[-1]
    H = w1.shape[0]
    Cout = w3.shape[0]

    d_row, d_budget, min_row_tiles = _device_plan()
    row_tile = d_row if row_tile is None else row_tile
    vmem_budget = d_budget if vmem_budget is None else vmem_budget

    xm = x.reshape(-1, C)
    M = xm.shape[0]

    w_it = jnp.dtype(w1.dtype).itemsize
    x_it = jnp.dtype(x.dtype).itemsize

    budget = vmem_budget - (2 << 20)           # headroom for Mosaic scratch
    weight_bytes = (2 * C * H + H * Cout + 2 * H + Cout) * w_it
    # Resident only if the (conservatively double-buffered) weights take at
    # most half the budget, leaving the rest for x/out/acc and temporaries.
    resident = 2 * weight_bytes <= budget // 2

    th = _pick_hidden_tile(H, resident)
    nh = H // th

    def vmem_footprint(tm):
        w_slice = weight_bytes if resident else (2 * C * th + th * Cout
                                                 + 2 * th + Cout) * w_it
        act = 2 * tm * C * x_it + 2 * tm * Cout * x_it + tm * Cout * 4
        tmp = 6 * tm * th * 4                  # x12 / x1 / x2 / sig / hidden
        return 2 * w_slice + act + tmp

    # Row tile: as large as the budget allows (more MXU flops per fetched
    # weight byte); sublane dim must stay a multiple of 8.
    tm = min(row_tile, _round_up(M, 8))
    while tm > 8 and vmem_footprint(tm) > budget:
        tm = _round_up(tm // 2, 8)
    # On dual-TensorCore chips keep >= one row tile per core so neither idles.
    while min_row_tiles > 1 and tm > 8 and _round_up(M, tm) // tm < min_row_tiles:
        tm = _round_up(tm // 2, 8)

    M_pad = _round_up(M, tm)
    if M_pad != M:
        xm = jnp.pad(xm, ((0, M_pad - M), (0, 0)))
    num_row_tiles = M_pad // tm

    # Fuse the gate/value projections: interleave [W1_tile | W2_tile] per
    # hidden tile so the kernel's first matmul is one (C, 2*th) dot.
    w1_t = w1.T.reshape(C, nh, th)
    w2_t = w2.T.reshape(C, nh, th)
    w12 = jnp.concatenate([w1_t, w2_t], axis=-1).reshape(C, 2 * H)
    b12 = jnp.concatenate([b1.reshape(nh, th), b2.reshape(nh, th)],
                          axis=-1).reshape(1, 2 * H)
    w3_t = w3.T                                # (H, Cout)
    b3_2 = b3.reshape(1, Cout)

    if resident:
        # Constant index maps => each weight is DMA'd into VMEM exactly once.
        w12_spec = pl.BlockSpec((C, 2 * H), lambda i, h: (0, 0))
        b12_spec = pl.BlockSpec((1, 2 * H), lambda i, h: (0, 0))
        w3_spec = pl.BlockSpec((H, Cout), lambda i, h: (0, 0))
    else:
        w12_spec = pl.BlockSpec((C, 2 * th), lambda i, h: (0, h))
        b12_spec = pl.BlockSpec((1, 2 * th), lambda i, h: (0, h))
        w3_spec = pl.BlockSpec((th, Cout), lambda i, h: (h, 0))

    weight_traffic = weight_bytes if resident else weight_bytes * num_row_tiles
    cost = pl.CostEstimate(
        flops=2 * M * C * (2 * H) + 2 * M * H * Cout,
        transcendentals=M * H,
        bytes_accessed=x_it * (M * C + M * Cout) + weight_traffic,
    )

    kernel = functools.partial(_swiglu_kernel, th=th, nh=nh,
                               resident=resident,
                               approx_sigmoid=approx_sigmoid)

    out = pl.pallas_call(
        kernel,
        out_shape=jax.ShapeDtypeStruct((M_pad, Cout), x.dtype),
        grid_spec=pltpu.PrefetchScalarGridSpec(
            num_scalar_prefetch=0,
            grid=(num_row_tiles, nh),
            in_specs=[
                pl.BlockSpec((tm, C), lambda i, h: (i, 0)),      # x row tile
                w12_spec,                                        # fused W1|W2
                b12_spec,                                        # fused b1|b2
                w3_spec,                                         # W3^T
                pl.BlockSpec((1, Cout), lambda i, h: (0, 0)),    # b3
            ],
            out_specs=pl.BlockSpec((tm, Cout), lambda i, h: (i, 0)),
            scratch_shapes=[pltpu.VMEM((tm, Cout), jnp.float32)],  # accumulator
        ),
        compiler_params=pltpu.CompilerParams(
            dimension_semantics=("parallel", "arbitrary"),
            vmem_limit_bytes=vmem_budget,
        ),
        cost_estimate=cost,
    )(xm, w12, b12, w3_t, b3_2)

    return out[:M].reshape(*orig_shape[:-1], Cout)


def swiglu_reference(x, w1, b1, w2, b2, w3, b3):
    """Pure-JAX replica of the PyTorch forward (subln=False, drop=0.0)."""
    x1 = x @ w1.T + b1
    x2 = x @ w2.T + b2
    hidden = jax.nn.silu(x1) * x2            # ffn_ln = Identity
    return hidden @ w3.T + b3                # Dropout(p=0.0) = identity


if __name__ == "__main__":
    B, N, C = 2, 8, 32                       # batch, seq, in_features
    H = 64                                   # hidden_features
    Cout = C                                 # out_features defaults to in_features

    key = jax.random.PRNGKey(0)
    kx, k1, k2, k3, k4, k5, k6 = jax.random.split(key, 7)
    x = jax.random.normal(kx, (B, N, C), dtype=jnp.float32)
    w1 = jax.random.normal(k1, (H, C), dtype=jnp.float32) * 0.05
    b1 = jax.random.normal(k2, (H,), dtype=jnp.float32) * 0.05
    w2 = jax.random.normal(k3, (H, C), dtype=jnp.float32) * 0.05
    b2 = jax.random.normal(k4, (H,), dtype=jnp.float32) * 0.05
    w3 = jax.random.normal(k5, (Cout, H), dtype=jnp.float32) * 0.05
    b3 = jax.random.normal(k6, (Cout,), dtype=jnp.float32) * 0.05

    out = swiglu_forward(x, w1, b1, w2, b2, w3, b3)
    out = jax.block_until_ready(out)

    ref = swiglu_reference(x, w1, b1, w2, b2, w3, b3)
    assert out.shape == (B, N, Cout)
    err = jnp.max(jnp.abs(out - ref))
    # approx_sigmoid=True routes the reciprocal through the EUP's approximate
    # path; tolerance is set accordingly (values here are O(0.1)).
    assert jnp.allclose(out, ref, atol=5e-3, rtol=5e-3), f"max err {err}"
    print("KERNEL_OK")
</pallas_src>

<mosaic_0001>
module attributes {stable_mosaic.version = 11 : i64} {
  func.func @_swiglu_kernel(%arg0: i32, %arg1: i32, %arg2: memref<8x32xf32, #tpu.memory_space<vmem>>, %arg3: memref<32x128xf32, #tpu.memory_space<vmem>>, %arg4: memref<1x128xf32, #tpu.memory_space<vmem>>, %arg5: memref<64x32xf32, #tpu.memory_space<vmem>>, %arg6: memref<1x32xf32, #tpu.memory_space<vmem>>, %arg7: memref<8x32xf32, #tpu.memory_space<vmem>>, %arg8: memref<8x32xf32, #tpu.memory_space<vmem>>) attributes {dimension_semantics = [#tpu.dimension_semantics<parallel>, #tpu.dimension_semantics<arbitrary>], iteration_bounds = array<i64: 2, 1>, scalar_prefetch = 0 : i64, scratch_operands = 1 : i64, tpu.core_type = #tpu.core_type<tc>, window_params = [{transform_indices = @transform_0, window_bounds = array<i64: 8, 32>}, {pipeline_mode = #tpu.pipeline_mode<synchronous>, transform_indices = @transform_1, window_bounds = array<i64: 32, 128>}, {pipeline_mode = #tpu.pipeline_mode<synchronous>, transform_indices = @transform_2, window_bounds = array<i64: 1, 128>}, {pipeline_mode = #tpu.pipeline_mode<synchronous>, transform_indices = @transform_3, window_bounds = array<i64: 64, 32>}, {pipeline_mode = #tpu.pipeline_mode<synchronous>, transform_indices = @transform_4, window_bounds = array<i64: 1, 32>}, {transform_indices = @transform_5, window_bounds = array<i64: 8, 32>}]} {
    %c0_i32 = arith.constant 0 : i32
    %0 = arith.cmpi eq, %arg1, %c0_i32 : i32
    %1 = arith.extui %0 : i1 to i32
    %c0_i32_0 = arith.constant 0 : i32
    %2 = arith.cmpi ne, %1, %c0_i32_0 : i32
    scf.if %2 {
      %c0_17 = arith.constant 0 : index
      %c0_18 = arith.constant 0 : index
      %27 = vector.load %arg6[%c0_17, %c0_18] : memref<1x32xf32, #tpu.memory_space<vmem>>, vector<1x32xf32>
      %28 = vector.shape_cast %27 : vector<1x32xf32> to vector<1x32xf32>
      %29 = vector.broadcast %28 : vector<1x32xf32> to vector<8x32xf32>
      %c0_19 = arith.constant 0 : index
      %c0_20 = arith.constant 0 : index
      %30 = vector.load %arg8[%c0_19, %c0_20] : memref<8x32xf32, #tpu.memory_space<vmem>>, vector<8x32xf32>
      tpu.vector_store %arg8[%c0_19, %c0_20], %29 {strides = array<i32>} : memref<8x32xf32, #tpu.memory_space<vmem>>, vector<8x32xf32>,
    } else {
    }
    %c0 = arith.constant 0 : index
    %c0_1 = arith.constant 0 : index
    %3 = vector.load %arg3[%c0, %c0_1] : memref<32x128xf32, #tpu.memory_space<vmem>>, vector<32x128xf32>
    %c0_2 = arith.constant 0 : index
    %c0_3 = arith.constant 0 : index
    %4 = vector.load %arg4[%c0_2, %c0_3] : memref<1x128xf32, #tpu.memory_space<vmem>>, vector<1x128xf32>
    %c0_4 = arith.constant 0 : index
    %c0_5 = arith.constant 0 : index
    %5 = vector.load %arg5[%c0_4, %c0_5] : memref<64x32xf32, #tpu.memory_space<vmem>>, vector<64x32xf32>
    %c0_6 = arith.constant 0 : index
    %c0_7 = arith.constant 0 : index
    %6 = vector.load %arg2[%c0_6, %c0_7] : memref<8x32xf32, #tpu.memory_space<vmem>>, vector<8x32xf32>
    %cst = arith.constant dense<0.000000e+00> : vector<8x128xf32>
    %7 = tpu.matmul %6, %3, %cst {dimension_numbers = #tpu.dot_dimension_numbers<[1], [0], [0], [1], [0, 0, 1, 1], [], []>} : vector<8x32xf32>, vector<32x128xf32>, vector<8x128xf32> -> vector<8x128xf32>
    %8 = vector.broadcast %4 : vector<1x128xf32> to vector<8x128xf32>
    %9 = arith.addf %7, %8 : vector<8x128xf32>
    %10 = vector.extract_strided_slice %9 {offsets = [0, 0], sizes = [8, 64], strides = [1, 1]} : vector<8x128xf32> to vector<8x64xf32>
    %11 = vector.extract_strided_slice %9 {offsets = [0, 64], sizes = [8, 64], strides = [1, 1]} : vector<8x128xf32> to vector<8x64xf32>
    %cst_8 = arith.constant 0.000000e+00 : f32
    %12 = vector.broadcast %cst_8 : f32 to vector<8x64xf32>
    %13 = arith.subf %12, %10 : vector<8x64xf32>
    %14 = math.exp %13 : vector<8x64xf32>
    %cst_9 = arith.constant 1.000000e+00 : f32
    %15 = vector.broadcast %cst_9 : f32 to vector<8x64xf32>
    %16 = arith.addf %15, %14 : vector<8x64xf32>
    %17 = tpu.reciprocal %16 {approx = true} : vector<8x64xf32> -> vector<8x64xf32>
    %18 = arith.mulf %10, %17 : vector<8x64xf32>
    %19 = arith.mulf %18, %11 : vector<8x64xf32>
    %c0_10 = arith.constant 0 : index
    %c0_11 = arith.constant 0 : index
    %20 = vector.load %arg8[%c0_10, %c0_11] : memref<8x32xf32, #tpu.memory_space<vmem>>, vector<8x32xf32>
    %cst_12 = arith.constant dense<0.000000e+00> : vector<8x32xf32>
    %21 = tpu.matmul %19, %5, %cst_12 {dimension_numbers = #tpu.dot_dimension_numbers<[1], [0], [0], [1], [0, 0, 1, 1], [], []>} : vector<8x64xf32>, vector<64x32xf32>, vector<8x32xf32> -> vector<8x32xf32>
    %22 = arith.addf %20, %21 : vector<8x32xf32>
    %c0_13 = arith.constant 0 : index
    %c0_14 = arith.constant 0 : index
    %23 = vector.load %arg8[%c0_13, %c0_14] : memref<8x32xf32, #tpu.memory_space<vmem>>, vector<8x32xf32>
    tpu.vector_store %arg8[%c0_13, %c0_14], %22 {strides = array<i32>} : memref<8x32xf32, #tpu.memory_space<vmem>>, vector<8x32xf32>,
    %c0_i32_15 = arith.constant 0 : i32
    %24 = arith.cmpi eq, %arg1, %c0_i32_15 : i32
    %25 = arith.extui %24 : i1 to i32
    %c0_i32_16 = arith.constant 0 : i32
    %26 = arith.cmpi ne, %25, %c0_i32_16 : i32
    scf.if %26 {
      %c0_17 = arith.constant 0 : index
      %c0_18 = arith.constant 0 : index
      %27 = vector.load %arg8[%c0_17, %c0_18] : memref<8x32xf32, #tpu.memory_space<vmem>>, vector<8x32xf32>
      %c0_19 = arith.constant 0 : index
      %c0_20 = arith.constant 0 : index
      %28 = vector.load %arg7[%c0_19, %c0_20] : memref<8x32xf32, #tpu.memory_space<vmem>>, vector<8x32xf32>
      tpu.vector_store %arg7[%c0_19, %c0_20], %27 {strides = array<i32>} : memref<8x32xf32, #tpu.memory_space<vmem>>, vector<8x32xf32>,
    } else {
    }
    return
  }
  func.func @transform_0(%arg0: i32, %arg1: i32) -> (i32, i32) {
    %c0_i32 = arith.constant 0 : i32
    %c0_i32_0 = arith.constant 0 : i32
    return %arg0, %c0_i32 : i32, i32
  }
  func.func @transform_1(%arg0: i32, %arg1: i32) -> (i32, i32) {
    %c0_i32 = arith.constant 0 : i32
    %c0_i32_0 = arith.constant 0 : i32
    %c0_i32_1 = arith.constant 0 : i32
    return %c0_i32, %c0_i32_0 : i32, i32
  }
  func.func @transform_2(%arg0: i32, %arg1: i32) -> (i32, i32) {
    %c0_i32 = arith.constant 0 : i32
    %c0_i32_0 = arith.constant 0 : i32
    %c0_i32_1 = arith.constant 0 : i32
    return %c0_i32, %c0_i32_0 : i32, i32
  }
  func.func @transform_3(%arg0: i32, %arg1: i32) -> (i32, i32) {
    %c0_i32 = arith.constant 0 : i32
    %c0_i32_0 = arith.constant 0 : i32
    %c0_i32_1 = arith.constant 0 : i32
    return %c0_i32, %c0_i32_0 : i32, i32
  }
  func.func @transform_4(%arg0: i32, %arg1: i32) -> (i32, i32) {
    %c0_i32 = arith.constant 0 : i32
    %c0_i32_0 = arith.constant 0 : i32
    %c0_i32_1 = arith.constant 0 : i32
    return %c0_i32, %c0_i32_0 : i32, i32
  }
  func.func @transform_5(%arg0: i32, %arg1: i32) -> (i32, i32) {
    %c0_i32 = arith.constant 0 : i32
    %c0_i32_0 = arith.constant 0 : i32
    return %arg0, %c0_i32 : i32, i32
  }
}

</mosaic_0001>

<llo_original>
// kernel: tpu_custom_call.1
$region0: #{tpu_custom_call.1}
  #allocation0 [shape = 'u32[]', space=smem, size = 0x4, offset = 0x4, fixed_abs, tag = 'smem constant byte address 0x4 - core index']
  #allocation1 [shape = 'u32[144,128]{1,0:T(1,128)}', space=vmem, size = 0x12000, scoped, tag = 'internal scratch']
  #allocation2 [shape = 'f32[8,32]{1,0:T(8,128)}', space=vmem, size = 0x1000, scoped, tag = 'scratch operand']
  %s0 = inlined_call_operand.vmem [shape: f32[16,32], index: 0, kind: input, shape index: {}]
  %s1 = inlined_call_operand.vmem [shape: f32[32,128], index: 1, kind: input, shape index: {}]
  %s2 = inlined_call_operand.vmem [shape: f32[1,128], index: 2, kind: input, shape index: {}]
  %s3 = inlined_call_operand.vmem [shape: f32[64,32], index: 3, kind: input, shape index: {}]
  %s4 = inlined_call_operand.vmem [shape: f32[1,32], index: 4, kind: input, shape index: {}]
  %s5 = inlined_call_operand.hbm [shape: f32[16,32], index: 5, kind: output, shape index: {}]
  %s6 = sld [smem:[#allocation0]]
  $region61: #{tpu_custom_call.1} parent=0
    _
  %s8 = ssub.s32 1, %s6
  %s9 = scalar_select 0, %s8, %s6
  $region1: #{tpu_custom_call.1} parent=0
    #allocation3 [shape = 'u8[8192]{0}', space=vmem, size = 0x2000, scoped, tag = 'output window, operand 0']
    #allocation4 [shape = 's32[2]{0}', space=sflag, size = 0x8, scoped, tag = 'scoped memory for tpu_custom_call.1']
    %10 = vsyncpa [#allocation4], 0
    %s11 = scalar_lea.sflag [#allocation4], 1
    %12 = vsyncpa %s11, 0
    loop: start=0, step=1, limit=4
    $region2: #{tpu_custom_call.1} parent=1 // loop_pre_header
      _
    $region3: #{tpu_custom_call.1} parent=1 // loop_header
      %s14 = sphi 0, %s18
      %p15 = scmp.ge.s32.totalorder %s14, 4
      %s21 = sphi 0, %s33
      %s22 = sphi 0, %s29
      %s23 = sphi 0, %s21
      %s24 = sphi 0, %s22
      %s25 = sphi 0, %s23
      %s26 = sphi 0, %s24
      %s36 = sphi 0, %s38
      %s39 = sphi 0, %s36
      %s40 = sphi 0, %s39
      %s56 = sphi 0, %s40
      %s60 = sphi 0, %s60
      %s62 = sphi 0, %s60
      %s63 = sphi 0, %s62
      %s77 = sphi 0, %s63
      %s81 = sphi 0, %s81
      %s83 = sphi 0, %s81
      %s84 = sphi 0, %s83
      %s98 = sphi 0, %s84
      %s102 = sphi 0, %s102
      %s104 = sphi 0, %s102
      %s105 = sphi 0, %s104
      %s119 = sphi 0, %s105
      %s123 = sphi 0, %s123
      %s125 = sphi 0, %s123
      %s126 = sphi 0, %s125
      %s140 = sphi 0, %s126
      %s146 = sphi 0, %s148
      %s149 = sphi 0, %s146
      %s150 = sphi 0, %s149
      %s166 = sphi 0, %s150
    $region4: #{tpu_custom_call.1} parent=1 // loop_header_branch
      %17 = sbr.rel (%p15) target = $region8
    $region5: #{tpu_custom_call.1} parent=1 // loop_body
      %s19 = ssub.s32 %s14, 1
      %s20 = ssub.s32 %s14, 2
      %s27 = sadd.s32 1, %s22
      %p28 = scmp.ge.s32.totalorder %s27, 1
      %s29 = scalar_select %p28, 0, %s27
      %s30 = sadd.s32 1, %s21
      %s31 = scalar_select %p28, %s30, %s21
      %p32 = scmp.ge.s32.totalorder %s31, 2
      %s33 = scalar_select %p32, 0, %s31
      %s34 = ssub.s32 %s21, %s33
      %p35 = scmp.eq.s32.totalorder %s34, 0
      %s37 = sadd.s32 %s36, 1
      %s38 = scalar_select %p35, %s36, %s37
      %p41 = pneg %p35
      %p42 = scmp.eq.s32.totalorder %s14, 1
      %p43 = por %p41, %p42
      %p44 = scmp.ne.s32.totalorder %s36, %s39
      %p45 = scmp.eq.s32.totalorder %s14, 0
      %p46 = por %p44, %p45
      %p47 = scmp.ne.s32.totalorder %s36, %s39
      %p48 = scmp.eq.s32.totalorder %s19, 1
      %p49 = por %p47, %p48
      %p50 = scmp.ne.s32.totalorder %s39, %s40
      %p51 = scmp.eq.s32.totalorder %s19, 0
      %p52 = por %p50, %p51
      %p53 = scmp.ne.s32.totalorder %s39, %s40
      %p54 = scmp.eq.s32.totalorder %s20, 1
      %p55 = por %p53, %p54
      %p57 = scmp.ne.s32.totalorder %s40, %s56
      %p58 = scmp.eq.s32.totalorder %s20, 0
      %p59 = por %p57, %p58
      %s61 = sadd.s32 %s60, 1
      %p64 = scmp.eq.s32.totalorder %s14, 1
      %p65 = scmp.ne.s32.totalorder %s60, %s62
      %p66 = scmp.eq.s32.totalorder %s14, 0
      %p67 = por %p65, %p66
      %p68 = scmp.ne.s32.totalorder %s60, %s62
      %p69 = scmp.eq.s32.totalorder %s19, 1
      %p70 = por %p68, %p69
      %p71 = scmp.ne.s32.totalorder %s62, %s63
      %p72 = scmp.eq.s32.totalorder %s19, 0
      %p73 = por %p71, %p72
      %p74 = scmp.ne.s32.totalorder %s62, %s63
      %p75 = scmp.eq.s32.totalorder %s20, 1
      %p76 = por %p74, %p75
      %p78 = scmp.ne.s32.totalorder %s63, %s77
      %p79 = scmp.eq.s32.totalorder %s20, 0
      %p80 = por %p78, %p79
      %s82 = sadd.s32 %s81, 1
      %p85 = scmp.eq.s32.totalorder %s14, 1
      %p86 = scmp.ne.s32.totalorder %s81, %s83
      %p87 = scmp.eq.s32.totalorder %s14, 0
      %p88 = por %p86, %p87
      %p89 = scmp.ne.s32.totalorder %s81, %s83
      %p90 = scmp.eq.s32.totalorder %s19, 1
      %p91 = por %p89, %p90
      %p92 = scmp.ne.s32.totalorder %s83, %s84
      %p93 = scmp.eq.s32.totalorder %s19, 0
      %p94 = por %p92, %p93
      %p95 = scmp.ne.s32.totalorder %s83, %s84
      %p96 = scmp.eq.s32.totalorder %s20, 1
      %p97 = por %p95, %p96
      %p99 = scmp.ne.s32.totalorder %s84, %s98
      %p100 = scmp.eq.s32.totalorder %s20, 0
      %p101 = por %p99, %p100
      %s103 = sadd.s32 %s102, 1
      %p106 = scmp.eq.s32.totalorder %s14, 1
      %p107 = scmp.ne.s32.totalorder %s102, %s104
      %p108 = scmp.eq.s32.totalorder %s14, 0
      %p109 = por %p107, %p108
      %p110 = scmp.ne.s32.totalorder %s102, %s104
      %p111 = scmp.eq.s32.totalorder %s19, 1
      %p112 = por %p110, %p111
      %p113 = scmp.ne.s32.totalorder %s104, %s105
      %p114 = scmp.eq.s32.totalorder %s19, 0
      %p115 = por %p113, %p114
      %p116 = scmp.ne.s32.totalorder %s104, %s105
      %p117 = scmp.eq.s32.totalorder %s20, 1
      %p118 = por %p116, %p117
      %p120 = scmp.ne.s32.totalorder %s105, %s119
      %p121 = scmp.eq.s32.totalorder %s20, 0
      %p122 = por %p120, %p121
      %s124 = sadd.s32 %s123, 1
      %p127 = scmp.eq.s32.totalorder %s14, 1
      %p128 = scmp.ne.s32.totalorder %s123, %s125
      %p129 = scmp.eq.s32.totalorder %s14, 0
      %p130 = por %p128, %p129
      %p131 = scmp.ne.s32.totalorder %s123, %s125
      %p132 = scmp.eq.s32.totalorder %s19, 1
      %p133 = por %p131, %p132
      %p134 = scmp.ne.s32.totalorder %s125, %s126
      %p135 = scmp.eq.s32.totalorder %s19, 0
      %p136 = por %p134, %p135
      %p137 = scmp.ne.s32.totalorder %s125, %s126
      %p138 = scmp.eq.s32.totalorder %s20, 1
      %p139 = por %p137, %p138
      %p141 = scmp.ne.s32.totalorder %s126, %s140
      %p142 = scmp.eq.s32.totalorder %s20, 0
      %p143 = por %p141, %p142
      %s144 = ssub.s32 %s21, %s33
      %p145 = scmp.eq.s32.totalorder %s144, 0
      %s147 = sadd.s32 %s146, 1
      %s148 = scalar_select %p145, %s146, %s147
      %p151 = pneg %p145
      %p152 = scmp.eq.s32.totalorder %s14, 1
      %p153 = por %p151, %p152
      %p154 = scmp.ne.s32.totalorder %s146, %s149
      %p155 = scmp.eq.s32.totalorder %s14, 0
      %p156 = por %p154, %p155
      %p157 = scmp.ne.s32.totalorder %s146, %s149
      %p158 = scmp.eq.s32.totalorder %s19, 1
      %p159 = por %p157, %p158
      %p160 = scmp.ne.s32.totalorder %s149, %s150
      %p161 = scmp.eq.s32.totalorder %s19, 0
      %p162 = por %p160, %p161
      %p163 = scmp.ne.s32.totalorder %s149, %s150
      %p164 = scmp.eq.s32.totalorder %s20, 1
      %p165 = por %p163, %p164
      %p167 = scmp.ne.s32.totalorder %s150, %s166
      %p168 = scmp.eq.s32.totalorder %s20, 0
      %p169 = por %p167, %p168
      %p170 = scmp.le.s32.totalorder 1, %s14
      %p171 = scmp.lt.s32.totalorder %s14, 3
      %p172 = pnand %p170, %p171
      %p173 = pneg %p172
      // Predicated region
      $region9: #{tpu_custom_call.1} parent=5 // pred_check
        _
      $region10: #{tpu_custom_call.1} parent=5 // pred_check_branch
        %175 = sbr.rel (%p172) target = $region12
      $region11: #{tpu_custom_call.1} parent=5 // pred_region
        %s176 = ssub.s32 %s14, 1
        // Predicated region
        $region13: #{tpu_custom_call.1} parent=11 // pred_check
          %p177 = pneg %p73
        $region14: #{tpu_custom_call.1} parent=11 // pred_check_branch
          %179 = sbr.rel (%p177) target = $region16
        $region15: #{tpu_custom_call.1} parent=11 // pred_region
          _
        $region16: #{tpu_custom_call.1} parent=11 // pred_fallthru
          _
        // Predicated region
        $region17: #{tpu_custom_call.1} parent=11 // pred_check
          %p180 = pneg %p94
        $region18: #{tpu_custom_call.1} parent=11 // pred_check_branch
          %182 = sbr.rel (%p180) target = $region20
        $region19: #{tpu_custom_call.1} parent=11 // pred_region
          _
        $region20: #{tpu_custom_call.1} parent=11 // pred_fallthru
          _
        // Predicated region
        $region21: #{tpu_custom_call.1} parent=11 // pred_check
          %p183 = pneg %p115
        $region22: #{tpu_custom_call.1} parent=11 // pred_check_branch
          %185 = sbr.rel (%p183) target = $region24
        $region23: #{tpu_custom_call.1} parent=11 // pred_region
          _
        $region24: #{tpu_custom_call.1} parent=11 // pred_fallthru
          _
        // Predicated region
        $region25: #{tpu_custom_call.1} parent=11 // pred_check
          %p186 = pneg %p136
        $region26: #{tpu_custom_call.1} parent=11 // pred_check_branch
          %188 = sbr.rel (%p186) target = $region28
        $region27: #{tpu_custom_call.1} parent=11 // pred_region
          _
        $region28: #{tpu_custom_call.1} parent=11 // pred_fallthru
          _
      $region12: #{tpu_custom_call.1} parent=5 // pred_fallthru
        _
      %p189 = scmp.lt.s32.totalorder %s14, 2
      // Predicated region
      $region29: #{tpu_custom_call.1} parent=5 // pred_check
        %p190 = pneg %p189
      $region30: #{tpu_custom_call.1} parent=5 // pred_check_branch
        %192 = sbr.rel (%p190) target = $region32
      $region31: #{tpu_custom_call.1} parent=5 // pred_region
        // Predicated region
        $region33: #{tpu_custom_call.1} parent=31 // pred_check
          %p193 = pneg %p46
        $region34: #{tpu_custom_call.1} parent=31 // pred_check_branch
          %195 = sbr.rel (%p193) target = $region36
        $region35: #{tpu_custom_call.1} parent=31 // pred_region
          %p196 = scmp.lt.s32.totalorder %s21, 1
          %s197 = scalar_select %p196, %s21, 1
          %s198 = smul.addr %s197, 8
          %s199 = scalar_lea.vmem %s0, %s198
        $region36: #{tpu_custom_call.1} parent=31 // pred_fallthru
          _
      $region32: #{tpu_custom_call.1} parent=5 // pred_fallthru
        _
      %p200 = scmp.le.s32.totalorder 1, %s14
      %p201 = scmp.lt.s32.totalorder %s14, 3
      %p202 = pnand %p200, %p201
      %p203 = pneg %p202
      // Predicated region
      $region37: #{tpu_custom_call.1} parent=5 // pred_check
        _
      $region38: #{tpu_custom_call.1} parent=5 // pred_check_branch
        %205 = sbr.rel (%p202) target = $region40
      $region39: #{tpu_custom_call.1} parent=5 // pred_region
        %s206 = ssub.s32 %s14, 1
        %p207 = scmp.lt.s32.totalorder %s23, 1
        %s208 = scalar_select %p207, %s23, 1
        %s209 = smul.addr %s208, 8
        %s210 = scalar_lea.vmem %s0, %s209
        %p211 = pneg %p52
        %p212 = pneg %p49
        %p213 = pneg %p73
        %p214 = pneg %p70
        %p215 = pneg %p94
        %p216 = pneg %p91
        %p217 = pneg %p115
        %p218 = pneg %p112
        %p219 = pneg %p136
        %p220 = pneg %p133
        %p221 = pneg %p162
        %p222 = pneg %p159
        %s223 = sand.u32 %s149, 1
        %s224 = scalar_lea.sflag [#allocation4], %s223
        %s225 = sand.u32 %s149, 1
        %s226 = smul.addr %s225, 8
        %s227 = scalar_lea.vmem [#allocation3], %s226
        %p228 = scmp.lt.s32.totalorder %s23, 1
        %s229 = scalar_select %p228, %s23, 1
        %s230 = smul.addr %s229, 8
        %s231 = scalar_lea.vmem %s0, %s230
        %p232 = scmp.eq.s32.totalorder %s24, 0
        // Predicated region
        $region41: #{tpu_custom_call.1} parent=39 // pred_check
          %p233 = pneg %p232
        $region42: #{tpu_custom_call.1} parent=39 // pred_check_branch
          %235 = sbr.rel (%p233) target = $region44
        $region43: #{tpu_custom_call.1} parent=39 // pred_region
          %v236 = vld [vmem:[%s4] sm:$0x1]
          %v238 = vlaneseq
          %v239 = vshrl.u32 %v238, 7
          %v240 = vsub.s32 0, %v239
          %v241 = vrot.slane %v236, %v240
          %vm243 = vcmask 261120
          %244 = vst.msk [vmem:[#allocation2] sm:$0xff] %vm243, %v241
        $region44: #{tpu_custom_call.1} parent=39 // pred_fallthru
          _
        %v245 = vld [vmem:[%s1] sm:$0xff]
        %v246 = vld [vmem:[%s1 + $0x8] sm:$0xff]
        %v247 = vld [vmem:[%s1 + $0x10] sm:$0xff]
        %v248 = vld [vmem:[%s1 + $0x18] sm:$0xff]
        %v249 = vld [vmem:[%s2] sm:$0x1]
        %v250 = vld [vmem:[%s3] sm:$0xff]
        %v251 = vld [vmem:[%s3 + $0x8] sm:$0xff]
        %v252 = vld [vmem:[%s3 + $0x10] sm:$0xff]
        %v253 = vld [vmem:[%s3 + $0x18] sm:$0xff]
        %v254 = vld [vmem:[%s3 + $0x20] sm:$0xff]
        %v255 = vld [vmem:[%s3 + $0x28] sm:$0xff]
        %v256 = vld [vmem:[%s3 + $0x30] sm:$0xff]
        %v257 = vld [vmem:[%s3 + $0x38] sm:$0xff]
        %v258 = vld [vmem:[%s231] sm:$0xff]
        %v260 = vlaneseq
        %v261 = vshrl.u32 %v260, 7
        %v262 = vsub.s32 0, %v261
        %v263 = vrot.slane %v249, %v262
        %vm265 = vcmask 261120
        %v267 = vsel %vm265, %v258, 0
        %269 = vmatprep.subr.mxu0 0.0
        %270 = vmatpush1.msra.mxu0 %v245
        %271 = vmatprep.subr.mxu0 0.0
        %272 = vmatpush1.msra.mxu0 %v246
        %273 = vmatprep.subr.mxu0 0.0
        %274 = vmatpush1.msra.mxu0 %v247
        %275 = vmatprep.subr.mxu0 0.0
        %276 = vmatpush1.msra.mxu0 %v248
        %277 = vmatprep.subr.mxu0 0.0
        %278 = vmatpush1.msra.mxu0 0.0
        %279 = vmatprep.subr.mxu0 0.0
        %280 = vmatpush1.msra.mxu0 0.0
        %281 = vmatprep.subr.mxu0 0.0
        %282 = vmatpush1.msra.mxu0 0.0
        %283 = vmatprep.subr.mxu0 0.0
        %284 = vmatpush1.msra.mxu0 0.0
        %285 = vmatprep.subr.mxu0 0.0
        %286 = vmatpush1.msra.mxu0 0.0
        %287 = vmatprep.subr.mxu0 0.0
        %288 = vmatpush1.msra.mxu0 0.0
        %289 = vmatprep.subr.mxu0 0.0
        %290 = vmatpush1.msra.mxu0 0.0
        %291 = vmatprep.subr.mxu0 0.0
        %292 = vmatpush1.msra.mxu0 0.0
        %293 = vmatprep.subr.mxu0 0.0
        %294 = vmatpush1.msra.mxu0 0.0
        %295 = vmatprep.subr.mxu0 0.0
        %296 = vmatpush1.msra.mxu0 0.0
        %297 = vmatprep.subr.mxu0 0.0
        %298 = vmatpush1.msra.mxu0 0.0
        %299 = vmatprep.subr.mxu0 0.0
        %300 = vmatpush1.msra.mxu0 0.0
        %301 = vmatprep.subr.mxu0 0.0
        %302 = vmatpush1.msra.mxu0 0.0
        %303 = vmatprep.subr.mxu0 0.0
        %304 = vmatpush1.msra.mxu0 0.0
        %305 = vmatprep.subr.mxu0 0.0
        %306 = vmatpush1.msra.mxu0 0.0
        %307 = vmatprep.subr.mxu0 0.0
        %308 = vmatpush1.msra.mxu0 0.0
        %309 = vmatprep.subr.mxu0 0.0
        %310 = vmatpush1.msra.mxu0 0.0
        %311 = vmatprep.subr.mxu0 0.0
        %312 = vmatpush1.msra.mxu0 0.0
        %313 = vmatprep.subr.mxu0 0.0
        %314 = vmatpush1.msra.mxu0 0.0
        %315 = vmatprep.subr.mxu0 0.0
        %316 = vmatpush1.msra.mxu0 0.0
        %317 = vmatprep.subr.mxu0 0.0
        %318 = vmatpush1.msra.mxu0 0.0
        %319 = vmatprep.subr.mxu0 0.0
        %320 = vmatpush1.msra.mxu0 0.0
        %321 = vmatprep.subr.mxu0 0.0
        %322 = vmatpush1.msra.mxu0 0.0
        %323 = vmatprep.subr.mxu0 0.0
        %324 = vmatpush1.msra.mxu0 0.0
        %325 = vmatprep.subr.mxu0 0.0
        %326 = vmatpush1.msra.mxu0 0.0
        %327 = vmatprep.subr.mxu0 0.0
        %328 = vmatpush1.msra.mxu0 0.0
        %329 = vmatprep.subr.mxu0 0.0
        %330 = vmatpush1.msra.mxu0 0.0
        %331 = vmatprep.subr.mxu0 0.0
        %332 = vmatpush1.msra.mxu0 0.0
        %333 = vmatprep.mubr.f32.mxu0 0.0
        %334 = vmatmul.mubr.f32.gmra.mrb[0].mxu0 %v267
        %v335 = vpop.f32.mrb[0].mxu0
        %v336 = vadd.f32 %v263, %v335
        %v337 = vpop.f32.mrb[0].mxu0
        %338 = vdwg.mxu0
        %v339 = vsub.f32 0.0, %v336
        %v340 = vmul.f32 %v339, 1.442695
        %v341 = vpow.pop %v340
        %v342 = vadd.f32 %v341, 1.0
        %v343 = vrcp.pop %v342
        %v344 = vmul.f32 %v336, %v343
        %346 = vrot.lane.b32.xlu0 %v336, 64
        %v347 = vpop.permute.xlu0 %346
        %v349 = vmul.f32 %v344, %v347
        %v350 = vld [vmem:[#allocation2] sm:$0xff]
        %vm351 = vcmask 523264
        %v353 = vsel %vm351, %v349, 0
        %355 = vmatprep.subr.mxu0 0.0
        %356 = vmatpush1.msra.mxu0 %v250
        %357 = vmatprep.subr.mxu0 0.0
        %358 = vmatpush1.msra.mxu0 %v251
        %359 = vmatprep.subr.mxu0 0.0
        %360 = vmatpush1.msra.mxu0 %v252
        %361 = vmatprep.subr.mxu0 0.0
        %362 = vmatpush1.msra.mxu0 %v253
        %363 = vmatprep.subr.mxu0 0.0
        %364 = vmatpush1.msra.mxu0 %v254
        %365 = vmatprep.subr.mxu0 0.0
        %366 = vmatpush1.msra.mxu0 %v255
        %367 = vmatprep.subr.mxu0 0.0
        %368 = vmatpush1.msra.mxu0 %v256
        %369 = vmatprep.subr.mxu0 0.0
        %370 = vmatpush1.msra.mxu0 %v257
        %371 = vmatprep.subr.mxu0 0.0
        %372 = vmatpush1.msra.mxu0 0.0
        %373 = vmatprep.subr.mxu0 0.0
        %374 = vmatpush1.msra.mxu0 0.0
        %375 = vmatprep.subr.mxu0 0.0
        %376 = vmatpush1.msra.mxu0 0.0
        %377 = vmatprep.subr.mxu0 0.0
        %378 = vmatpush1.msra.mxu0 0.0
        %379 = vmatprep.subr.mxu0 0.0
        %380 = vmatpush1.msra.mxu0 0.0
        %381 = vmatprep.subr.mxu0 0.0
        %382 = vmatpush1.msra.mxu0 0.0
        %383 = vmatprep.subr.mxu0 0.0
        %384 = vmatpush1.msra.mxu0 0.0
        %385 = vmatprep.subr.mxu0 0.0
        %386 = vmatpush1.msra.mxu0 0.0
        %387 = vmatprep.subr.mxu0 0.0
        %388 = vmatpush1.msra.mxu0 0.0
        %389 = vmatprep.subr.mxu0 0.0
        %390 = vmatpush1.msra.mxu0 0.0
        %391 = vmatprep.subr.mxu0 0.0
        %392 = vmatpush1.msra.mxu0 0.0
        %393 = vmatprep.subr.mxu0 0.0
        %394 = vmatpush1.msra.mxu0 0.0
        %395 = vmatprep.subr.mxu0 0.0
        %396 = vmatpush1.msra.mxu0 0.0
        %397 = vmatprep.subr.mxu0 0.0
        %398 = vmatpush1.msra.mxu0 0.0
        %399 = vmatprep.subr.mxu0 0.0
        %400 = vmatpush1.msra.mxu0 0.0
        %401 = vmatprep.subr.mxu0 0.0
        %402 = vmatpush1.msra.mxu0 0.0
        %403 = vmatprep.subr.mxu0 0.0
        %404 = vmatpush1.msra.mxu0 0.0
        %405 = vmatprep.subr.mxu0 0.0
        %406 = vmatpush1.msra.mxu0 0.0
        %407 = vmatprep.subr.mxu0 0.0
        %408 = vmatpush1.msra.mxu0 0.0
        %409 = vmatprep.subr.mxu0 0.0
        %410 = vmatpush1.msra.mxu0 0.0
        %411 = vmatprep.subr.mxu0 0.0
        %412 = vmatpush1.msra.mxu0 0.0
        %413 = vmatprep.subr.mxu0 0.0
        %414 = vmatpush1.msra.mxu0 0.0
        %415 = vmatprep.subr.mxu0 0.0
        %416 = vmatpush1.msra.mxu0 0.0
        %417 = vmatprep.subr.mxu0 0.0
        %418 = vmatpush1.msra.mxu0 0.0
        %419 = vmatprep.mubr.f32.mxu0 0.0
        %420 = vmatmul.mubr.f32.gmra.mrb[0].mxu0 %v353
        %v421 = vpop.f32.mrb[0].mxu0
        %v422 = vadd.f32 0.0, %v421
        %v423 = vpop.f32.mrb[0].mxu0
        %424 = vdwg.mxu0
        %v425 = vadd.f32 %v350, %v422
        %426 = vst.msk [vmem:[#allocation2] sm:$0xff] %vm265, %v425
        // Predicated region
        $region45: #{tpu_custom_call.1} parent=39 // pred_check
          %p427 = pneg %p232
        $region46: #{tpu_custom_call.1} parent=39 // pred_check_branch
          %429 = sbr.rel (%p427) target = $region48
        $region47: #{tpu_custom_call.1} parent=39 // pred_region
          %v430 = vld [vmem:[#allocation2] sm:$0xff]
          %431 = vst.msk [vmem:[%s227] sm:$0xff] %vm265, %v430
        $region48: #{tpu_custom_call.1} parent=39 // pred_fallthru
          _
        %s432 = sand.u32 %s149, 1
        %s433 = scalar_lea.sflag [#allocation4], %s432
        %s434 = sand.u32 %s149, 1
        %s435 = smul.addr %s434, 8
        %s436 = scalar_lea.vmem [#allocation3], %s435
        // Predicated region
        $region49: #{tpu_custom_call.1} parent=39 // pred_check
          %p437 = pneg %p159
        $region50: #{tpu_custom_call.1} parent=39 // pred_check_branch
          %439 = sbr.rel (%p437) target = $region52
        $region51: #{tpu_custom_call.1} parent=39 // pred_region
          %s441 = ssub.s32 128, 128
          %442 = vsyncadd %s433, %s441
          %s443 = smul.addr %s23, 128
          %s444 = scalar_lea.hbm %s5, %s443
          %s446 = sshll.u32 %s436, 4
          %s447 = int_to_ptr.vmem [resolvable:$true] %s446
          %449 = dma.vmem_to_hbm [thread:$0]  %s447, 128, %s444, %s433
        $region52: #{tpu_custom_call.1} parent=39 // pred_fallthru
          _
      $region40: #{tpu_custom_call.1} parent=5 // pred_fallthru
        _
      %p450 = scmp.le.s32.totalorder 2, %s14
      // Predicated region
      $region53: #{tpu_custom_call.1} parent=5 // pred_check
        %p451 = pneg %p450
      $region54: #{tpu_custom_call.1} parent=5 // pred_check_branch
        %453 = sbr.rel (%p451) target = $region56
      $region55: #{tpu_custom_call.1} parent=5 // pred_region
        %s454 = ssub.s32 %s14, 2
        // Predicated region
        $region57: #{tpu_custom_call.1} parent=55 // pred_check
          %p455 = pneg %p165
        $region58: #{tpu_custom_call.1} parent=55 // pred_check_branch
          %457 = sbr.rel (%p455) target = $region60
        $region59: #{tpu_custom_call.1} parent=55 // pred_region
          %s458 = sand.u32 %s150, 1
          %s459 = scalar_lea.sflag [#allocation4], %s458
          %s460 = sand.u32 %s150, 1
          %s461 = smul.addr %s460, 8
          %s462 = scalar_lea.vmem [#allocation3], %s461
          %463 = dma.done %s459, 128
        $region60: #{tpu_custom_call.1} parent=55 // pred_fallthru
          _
      $region56: #{tpu_custom_call.1} parent=5 // pred_fallthru
        _
    $region6: #{tpu_custom_call.1} parent=1 // loop_footer
      %s18 = sadd.s32 1, %s14
    $region7: #{tpu_custom_call.1} parent=1 // loop_footer_branch
      %13 = sbr.rel target = $region3
    $region8: #{tpu_custom_call.1} parent=1 // loop_exit
      _
    %464 = vsyncpa [#allocation4], 1
    %s465 = scalar_lea.sflag [#allocation4], 1
    %466 = vsyncpa %s465, 1

</llo_original>
